<compile_context>
chip_gen: v7x
topology: tpu7x:2x2x1
jax: 0.10.0
libtpu: 0.0.40
codegen_flags: <defaults>
</compile_context>

<pallas_src>
import jax
import jax.numpy as jnp
from jax.experimental import pallas as pl
from jax.experimental.pallas import tpu as pltpu


def _copy_kernel(x_ref, o_ref):
    # Pure identity copy of the current tile (mem-bound; DMA does the work).
    o_ref[...] = x_ref[...]


# Lane-width candidates (multiples of 128, widest first): wider rows mean fewer
# grid steps, fewer DMA descriptors, and fully unmasked lane-dense stores.
_LANE_CANDIDATES = (2048, 1024, 512, 256, 128)

# ~8 MiB blocks: with double buffering on input + output that is ~32 MiB of VMEM.
# We raise the scoped VMEM limit to 48 MiB explicitly, which is within v7x's
# 64 MiB/TC physical VMEM and well within v5e/v6e's 128 MiB.
_TARGET_BLOCK_BYTES = 8 * 1024 * 1024
_VMEM_LIMIT_BYTES = 48 << 20


def view_flatten(x):
    """Equivalent of torch.Tensor.view(-1) for a contiguous array."""
    n = x.size
    flat = jnp.reshape(x, (-1,))  # metadata-only row-major flatten
    if n == 0:
        return flat

    dtype = x.dtype
    itemsize = jnp.dtype(dtype).itemsize
    # dtype-aware minimum sublane count: 8 (f32), 16 (bf16/f16), 32 (int8/fp8).
    min_sub = max(8, 32 // itemsize)

    # Pick the widest lane width that divides n exactly -> no pad, no slice.
    lane = None
    for cand in _LANE_CANDIDATES:
        if n % cand == 0:
            lane = cand
            break
    if lane is None:
        # Ragged element count: view(-1) is metadata-only; a pad + trailing slice
        # would add two extra full-array HBM passes for zero semantic benefit,
        # so return the byte-identical reshape directly (per perf review).
        return flat

    rows = n // lane
    row_bytes = lane * itemsize
    x2d = jnp.reshape(flat, (rows, lane))

    if rows * row_bytes <= _TARGET_BLOCK_BYTES:
        # Small input: one full-array block (block == full dims is always legal,
        # regardless of dtype packing), so no pipeline-step overhead.
        tile_rows = rows
    else:
        # Large input: ~8 MiB blocks, rounded to the dtype's sublane minimum.
        tile_rows = max(
            min_sub, (_TARGET_BLOCK_BYTES // row_bytes) // min_sub * min_sub
        )

    grid = (pl.cdiv(rows, tile_rows),)

    out2d = pl.pallas_call(
        _copy_kernel,
        out_shape=jax.ShapeDtypeStruct((rows, lane), dtype),
        grid_spec=pltpu.PrefetchScalarGridSpec(
            num_scalar_prefetch=0,
            grid=grid,
            in_specs=[pl.BlockSpec((tile_rows, lane), lambda i: (i, 0))],
            out_specs=pl.BlockSpec((tile_rows, lane), lambda i: (i, 0)),
        ),
        # NOTE: no input_output_aliases — aliasing a reshape of a non-donated jit
        # input forces XLA to insert a defensive full-array copy (3 HBM passes
        # instead of 2). Read + write of a fresh output buffer is strictly cheaper.
        compiler_params=pltpu.CompilerParams(
            dimension_semantics=("parallel",),
            vmem_limit_bytes=_VMEM_LIMIT_BYTES,
        ),
    )(x2d)

    return jnp.reshape(out2d, (-1,))


if __name__ == "__main__":
    key = jax.random.PRNGKey(0)
    flatten = jax.jit(view_flatten)

    # 1) Small NCHW input, f32 (shape consistent with a generic View_fun forward).
    x = jax.random.normal(key, (2, 4, 16, 16), dtype=jnp.float32)
    out = jax.block_until_ready(flatten(x))
    ref = jnp.reshape(x, (-1,))
    assert out.shape == (2 * 4 * 16 * 16,)
    assert out.dtype == x.dtype
    assert bool(jnp.array_equal(out, ref))

    # 2) Ragged element count (not a multiple of 128): metadata-only reshape path.
    y = jax.random.normal(jax.random.PRNGKey(1), (3, 5, 7, 11), dtype=jnp.float32)
    out_y = jax.block_until_ready(flatten(y))
    assert bool(jnp.array_equal(out_y, jnp.reshape(y, (-1,))))

    # 3) Sub-32-bit dtype exercises the dtype-aware tiling logic.
    z = jax.random.normal(jax.random.PRNGKey(2), (2, 4, 16, 16)).astype(jnp.bfloat16)
    out_z = jax.block_until_ready(flatten(z))
    assert bool(jnp.array_equal(out_z, jnp.reshape(z, (-1,))))

    print("KERNEL_OK")
</pallas_src>

<mosaic_0001>
module attributes {stable_mosaic.version = 11 : i64} {
  func.func @_copy_kernel(%arg0: i32, %arg1: memref<1x2048xf32, #tpu.memory_space<vmem>>, %arg2: memref<1x2048xf32, #tpu.memory_space<vmem>>) attributes {dimension_semantics = [#tpu.dimension_semantics<parallel>], iteration_bounds = array<i64: 1>, scalar_prefetch = 0 : i64, scratch_operands = 0 : i64, tpu.core_type = #tpu.core_type<tc>, window_params = [{transform_indices = @transform_0, window_bounds = array<i64: 1, 2048>}, {transform_indices = @transform_1, window_bounds = array<i64: 1, 2048>}]} {
    %c0 = arith.constant 0 : index
    %c0_0 = arith.constant 0 : index
    %0 = vector.load %arg1[%c0, %c0_0] : memref<1x2048xf32, #tpu.memory_space<vmem>>, vector<1x2048xf32>
    %c0_1 = arith.constant 0 : index
    %c0_2 = arith.constant 0 : index
    %1 = vector.load %arg2[%c0_1, %c0_2] : memref<1x2048xf32, #tpu.memory_space<vmem>>, vector<1x2048xf32>
    tpu.vector_store %arg2[%c0_1, %c0_2], %0 {strides = array<i32>} : memref<1x2048xf32, #tpu.memory_space<vmem>>, vector<1x2048xf32>,
    return
  }
  func.func @transform_0(%arg0: i32) -> (i32, i32) {
    %c0_i32 = arith.constant 0 : i32
    %c0_i32_0 = arith.constant 0 : i32
    return %arg0, %c0_i32 : i32, i32
  }
  func.func @transform_1(%arg0: i32) -> (i32, i32) {
    %c0_i32 = arith.constant 0 : i32
    %c0_i32_0 = arith.constant 0 : i32
    return %arg0, %c0_i32 : i32, i32
  }
}

</mosaic_0001>

<llo_original>
// kernel: view_flatten.1
$region0: #{view_flatten.1}
  #allocation0 [shape = 'u32[]', space=smem, size = 0x4, offset = 0x4, fixed_abs, tag = 'smem constant byte address 0x4 - core index']
  #allocation1 [shape = 'u32[144,128]{1,0:T(1,128)}', space=vmem, size = 0x12000, scoped, tag = 'internal scratch']
  %s0 = inlined_call_operand.vmem [shape: f32[1,2048], index: 0, kind: input, shape index: {}]
  %s1 = inlined_call_operand.hbm [shape: f32[1,2048], index: 1, kind: output, shape index: {}]
  %s2 = sld [smem:[#allocation0]]
  $region14: #{view_flatten.1} parent=0
    _
  %s4 = ssub.s32 1, %s2
  %s5 = scalar_select 0, %s4, %s2
  $region1: #{view_flatten.1} parent=0
    #allocation2 [shape = 'u8[8192]{0}', space=vmem, size = 0x2000, scoped, tag = 'output window, operand 0, single buffered']
    #allocation3 [shape = 's32[1]{0}', space=sflag, size = 0x4, scoped, tag = 'scoped memory for view_flatten.1']
    %6 = vsyncpa [#allocation3], 0
    // Predicated region
    $region2: #{view_flatten.1} parent=1 // pred_check
      _
    $region3: #{view_flatten.1} parent=1 // pred_check_branch
      %8 = sbr.rel (0) target = $region5
    $region4: #{view_flatten.1} parent=1 // pred_region
      _
    $region5: #{view_flatten.1} parent=1 // pred_fallthru
      _
    %v9 = vld [vmem:[%s0] sm:$0xff]
    %v10 = vld [vmem:[%s0 + $0x8] sm:$0xff]
    %11 = vst [vmem:[#allocation2] sm:$0xff] %v9
    %12 = vst [vmem:[#allocation2 + $0x8] sm:$0xff] %v10
    // Predicated region
    $region6: #{view_flatten.1} parent=1 // pred_check
      _
    $region7: #{view_flatten.1} parent=1 // pred_check_branch
      %14 = sbr.rel (0) target = $region9
    $region8: #{view_flatten.1} parent=1 // pred_region
      %s16 = ssub.s32 256, 256
      %17 = vsyncadd [#allocation3], %s16
      %s19 = sshll.u32 [#allocation2], 4
      %s20 = int_to_ptr.vmem [resolvable:$true] %s19
      %22 = dma.vmem_to_hbm [thread:$0]  %s20, 256, %s1, [#allocation3]
    $region9: #{view_flatten.1} parent=1 // pred_fallthru
      _
    // Predicated region
    $region10: #{view_flatten.1} parent=1 // pred_check
      _
    $region11: #{view_flatten.1} parent=1 // pred_check_branch
      %24 = sbr.rel (0) target = $region13
    $region12: #{view_flatten.1} parent=1 // pred_region
      %25 = dma.done [#allocation3], 256
    $region13: #{view_flatten.1} parent=1 // pred_fallthru
      _
    %26 = vsyncpa [#allocation3], 1

</llo_original>
